<compile_context>
chip_gen: v6e
topology: v6e:2x2x1
jax: 0.10.0
libtpu: 0.0.40
codegen_flags: <defaults>
</compile_context>

<pallas_src>
import math

import jax
import jax.numpy as jnp
from jax.experimental import pallas as pl
from jax.experimental.pallas import tpu as pltpu


H_PAD = 128  # hidden dims (100 / 50 / 10) zero-padded to one lane-aligned width


def _round_up(x, m):
    return ((x + m - 1) // m) * m


def mlp_kernel(x_ref,
               w1_ref, b1_ref,
               w2_ref, b2_ref,
               w3_ref, b3_ref,
               w4_ref, b4_ref,
               o_ref):
    # x arrives bf16 from the wrapper; weights are bf16; accumulate / bias /
    # ReLU / tanh in f32.
    x = x_ref[...]                                                  # (tb, 180) bf16

    h = jnp.dot(x, w1_ref[...], preferred_element_type=jnp.float32) + b1_ref[...]
    h = jnp.maximum(h, 0.0)

    h = jnp.dot(h.astype(jnp.bfloat16), w2_ref[...],
                preferred_element_type=jnp.float32) + b2_ref[...]
    h = jnp.maximum(h, 0.0)

    h = jnp.dot(h.astype(jnp.bfloat16), w3_ref[...],
                preferred_element_type=jnp.float32) + b3_ref[...]
    h = jnp.maximum(h, 0.0)

    h = jnp.dot(h.astype(jnp.bfloat16), w4_ref[...],
                preferred_element_type=jnp.float32) + b4_ref[...]   # (tb, 128)

    out_dim = o_ref.shape[0]
    # Keep only the real output column(s); transpose to a lane-dense
    # (out_dim, tb) row (XLU, cheap) so the store is lane-dense, then tanh only
    # the real values.
    y = jnp.transpose(h[:, :out_dim])                               # (out_dim, tb)
    o_ref[...] = jnp.tanh(y).astype(o_ref.dtype)


def pad_params(params):
    """Zero-pad to lane-aligned shapes and cast weights to bf16 (done once)."""
    def pad2(a, rows, cols, dtype):
        out = jnp.zeros((rows, cols), dtype)
        return out.at[:a.shape[0], :a.shape[1]].set(a.astype(dtype))

    in_dim = params["w1"].shape[0]
    return dict(
        w1=pad2(params["w1"], in_dim, H_PAD, jnp.bfloat16),   # K stays 180 (no K pad)
        b1=pad2(params["b1"], 1, H_PAD, jnp.float32),
        w2=pad2(params["w2"], H_PAD, H_PAD, jnp.bfloat16),
        b2=pad2(params["b2"], 1, H_PAD, jnp.float32),
        w3=pad2(params["w3"], H_PAD, H_PAD, jnp.bfloat16),
        b3=pad2(params["b3"], 1, H_PAD, jnp.float32),
        w4=pad2(params["w4"], H_PAD, H_PAD, jnp.bfloat16),
        b4=pad2(params["b4"], 1, H_PAD, jnp.float32),
    )


def example_model_forward(x, padded_params, out_dim=1, block_b=1024):
    """x: (B, 180) float array. padded_params: output of pad_params()."""
    B, in_dim = x.shape
    p = padded_params

    b8 = _round_up(B, 8)
    tb = min(_round_up(block_b, 128), b8)
    if b8 > tb or b8 >= 256:
        # Multi-step grid: tile must be a multiple of 128 (lane-dense output
        # blocks) and small enough that >= 2 grid steps exist so v7x's second
        # TensorCore participates via the "parallel" axis.
        tb = min(_round_up(block_b, 128), _round_up(pl.cdiv(b8, 2), 128))
        b_pad = _round_up(b8, tb)
    else:
        tb = b8
        b_pad = b8

    # bf16 cast in the wrapper (halves the dominant HBM read); fuse the batch
    # pad with the cast only when actually needed.  No 180->256 feature pad.
    x_bf = x.astype(jnp.bfloat16)
    if b_pad != B:
        x_in = jnp.zeros((b_pad, in_dim), jnp.bfloat16).at[:B, :].set(x_bf)
    else:
        x_in = x_bf

    grid = (b_pad // tb,)

    def resident(shape):
        # Same block every grid step -> stays VMEM-resident.
        return pl.BlockSpec(shape, lambda i: (0, 0))

    flops = 2 * b_pad * (in_dim * H_PAD + 3 * H_PAD * H_PAD)
    bytes_accessed = int(x_in.size * 2 + out_dim * b_pad * 4
                         + sum(int(v.size) * v.dtype.itemsize for v in p.values()))

    out = pl.pallas_call(
        mlp_kernel,
        out_shape=jax.ShapeDtypeStruct((out_dim, b_pad), jnp.float32),
        grid=grid,
        in_specs=[
            pl.BlockSpec((tb, in_dim), lambda i: (i, 0)),
            resident(p["w1"].shape), resident(p["b1"].shape),
            resident(p["w2"].shape), resident(p["b2"].shape),
            resident(p["w3"].shape), resident(p["b3"].shape),
            resident(p["w4"].shape), resident(p["b4"].shape),
        ],
        out_specs=pl.BlockSpec((out_dim, tb), lambda i: (0, i)),
        compiler_params=pltpu.CompilerParams(
            dimension_semantics=("parallel",)),
        cost_estimate=pl.CostEstimate(
            flops=flops,
            transcendentals=b_pad * out_dim,
            bytes_accessed=bytes_accessed),
    )(x_in,
      p["w1"], p["b1"], p["w2"], p["b2"],
      p["w3"], p["b3"], p["w4"], p["b4"])

    # (out_dim, b_pad) -> (B, out_dim); drop padded batch rows (tiny slice).
    return jnp.transpose(out[:, :B])


def xavier_uniform(key, fan_in, fan_out, dtype=jnp.float32):
    # Matches nn.init.xavier_uniform_ (gain=1): U(-a, a), a = sqrt(6/(fan_in+fan_out)).
    a = math.sqrt(6.0 / (fan_in + fan_out))
    # Stored as (fan_in, fan_out) so the kernel computes x @ W directly.
    return jax.random.uniform(key, (fan_in, fan_out), dtype=dtype, minval=-a, maxval=a)


def linear_bias(key, fan_in, fan_out, dtype=jnp.float32):
    # PyTorch nn.Linear default bias init: U(-1/sqrt(fan_in), 1/sqrt(fan_in)).
    bound = 1.0 / math.sqrt(fan_in)
    return jax.random.uniform(key, (1, fan_out), dtype=dtype, minval=-bound, maxval=bound)


def init_params(key, input_dim=180, output_dim=1):
    dims = [(input_dim, 100), (100, 50), (50, 10), (10, output_dim)]
    keys = jax.random.split(key, 2 * len(dims))
    params = {}
    for i, (fi, fo) in enumerate(dims):
        params[f"w{i+1}"] = xavier_uniform(keys[2 * i], fi, fo)
        params[f"b{i+1}"] = linear_bias(keys[2 * i + 1], fi, fo)
    return params


def ref_forward_bf16(x, params):
    # Reference with the same bf16-operand / f32-accumulate arithmetic as the kernel.
    h = x.astype(jnp.bfloat16)
    h = jnp.maximum(jnp.dot(h, params["w1"].astype(jnp.bfloat16),
                            preferred_element_type=jnp.float32) + params["b1"], 0.0)
    h = jnp.maximum(jnp.dot(h.astype(jnp.bfloat16), params["w2"].astype(jnp.bfloat16),
                            preferred_element_type=jnp.float32) + params["b2"], 0.0)
    h = jnp.maximum(jnp.dot(h.astype(jnp.bfloat16), params["w3"].astype(jnp.bfloat16),
                            preferred_element_type=jnp.float32) + params["b3"], 0.0)
    h = jnp.dot(h.astype(jnp.bfloat16), params["w4"].astype(jnp.bfloat16),
                preferred_element_type=jnp.float32) + params["b4"]
    return jnp.tanh(h)


if __name__ == "__main__":
    key = jax.random.PRNGKey(0)
    pkey, xkey1, xkey2 = jax.random.split(key, 3)

    input_dim, output_dim = 180, 1
    params = init_params(pkey, input_dim=input_dim, output_dim=output_dim)
    padded = pad_params(params)  # one-time padding / bf16 cast

    # TODO(synk): at batch ~8 this MLP is launch/latency dominated; in production
    # fuse it into the caller rather than running a standalone pallas_call.

    # Small-batch path (single grid step, no batch padding).
    x_small = jax.random.normal(xkey1, (8, input_dim), dtype=jnp.float32)
    out_small = jax.block_until_ready(
        example_model_forward(x_small, padded, out_dim=output_dim))
    ref_small = ref_forward_bf16(x_small, params)
    assert out_small.shape == (8, output_dim)
    err_s = float(jnp.max(jnp.abs(out_small - ref_small)))
    assert jnp.allclose(out_small, ref_small, atol=2e-2, rtol=2e-2), f"max abs err {err_s}"

    # Multi-step grid path (grid=2, lane-dense 256-wide output blocks, padded
    # batch rows sliced off in the wrapper).
    x_big = jax.random.normal(xkey2, (384, input_dim), dtype=jnp.float32)
    out_big = jax.block_until_ready(
        example_model_forward(x_big, padded, out_dim=output_dim))
    ref_big = ref_forward_bf16(x_big, params)
    assert out_big.shape == (384, output_dim)
    err_b = float(jnp.max(jnp.abs(out_big - ref_big)))
    assert jnp.allclose(out_big, ref_big, atol=2e-2, rtol=2e-2), f"max abs err {err_b}"

    print("KERNEL_OK")
</pallas_src>

<mosaic_0001>
module attributes {stable_mosaic.version = 11 : i64} {
  func.func @mlp_kernel(%arg0: i32, %arg1: memref<8x180xbf16, #tpu.memory_space<vmem>>, %arg2: memref<180x128xbf16, #tpu.memory_space<vmem>>, %arg3: memref<1x128xf32, #tpu.memory_space<vmem>>, %arg4: memref<128x128xbf16, #tpu.memory_space<vmem>>, %arg5: memref<1x128xf32, #tpu.memory_space<vmem>>, %arg6: memref<128x128xbf16, #tpu.memory_space<vmem>>, %arg7: memref<1x128xf32, #tpu.memory_space<vmem>>, %arg8: memref<128x128xbf16, #tpu.memory_space<vmem>>, %arg9: memref<1x128xf32, #tpu.memory_space<vmem>>, %arg10: memref<1x8xf32, #tpu.memory_space<vmem>>) attributes {dimension_semantics = [#tpu.dimension_semantics<parallel>], iteration_bounds = array<i64: 1>, scalar_prefetch = 0 : i64, scratch_operands = 0 : i64, tpu.core_type = #tpu.core_type<tc>, window_params = [{transform_indices = @transform_0, window_bounds = array<i64: 8, 180>}, {pipeline_mode = #tpu.pipeline_mode<synchronous>, transform_indices = @transform_1, window_bounds = array<i64: 180, 128>}, {pipeline_mode = #tpu.pipeline_mode<synchronous>, transform_indices = @transform_2, window_bounds = array<i64: 1, 128>}, {pipeline_mode = #tpu.pipeline_mode<synchronous>, transform_indices = @transform_3, window_bounds = array<i64: 128, 128>}, {pipeline_mode = #tpu.pipeline_mode<synchronous>, transform_indices = @transform_4, window_bounds = array<i64: 1, 128>}, {pipeline_mode = #tpu.pipeline_mode<synchronous>, transform_indices = @transform_5, window_bounds = array<i64: 128, 128>}, {pipeline_mode = #tpu.pipeline_mode<synchronous>, transform_indices = @transform_6, window_bounds = array<i64: 1, 128>}, {pipeline_mode = #tpu.pipeline_mode<synchronous>, transform_indices = @transform_7, window_bounds = array<i64: 128, 128>}, {pipeline_mode = #tpu.pipeline_mode<synchronous>, transform_indices = @transform_8, window_bounds = array<i64: 1, 128>}, {transform_indices = @transform_9, window_bounds = array<i64: 1, 8>}]} {
    %c0 = arith.constant 0 : index
    %c0_0 = arith.constant 0 : index
    %0 = vector.load %arg1[%c0, %c0_0] : memref<8x180xbf16, #tpu.memory_space<vmem>>, vector<8x180xbf16>
    %c0_1 = arith.constant 0 : index
    %c0_2 = arith.constant 0 : index
    %1 = vector.load %arg2[%c0_1, %c0_2] : memref<180x128xbf16, #tpu.memory_space<vmem>>, vector<180x128xbf16>
    %cst = arith.constant dense<0.000000e+00> : vector<8x128xf32>
    %2 = tpu.matmul %0, %1, %cst {dimension_numbers = #tpu.dot_dimension_numbers<[1], [0], [0], [1], [0, 0, 1, 1], [], []>} : vector<8x180xbf16>, vector<180x128xbf16>, vector<8x128xf32> -> vector<8x128xf32>
    %c0_3 = arith.constant 0 : index
    %c0_4 = arith.constant 0 : index
    %3 = vector.load %arg3[%c0_3, %c0_4] : memref<1x128xf32, #tpu.memory_space<vmem>>, vector<1x128xf32>
    %4 = vector.broadcast %3 : vector<1x128xf32> to vector<8x128xf32>
    %5 = arith.addf %2, %4 : vector<8x128xf32>
    %cst_5 = arith.constant 0.000000e+00 : f32
    %6 = vector.broadcast %cst_5 : f32 to vector<8x128xf32>
    %7 = arith.maximumf %5, %6 : vector<8x128xf32>
    %8 = arith.truncf %7 : vector<8x128xf32> to vector<8x128xbf16>
    %c0_6 = arith.constant 0 : index
    %c0_7 = arith.constant 0 : index
    %9 = vector.load %arg4[%c0_6, %c0_7] : memref<128x128xbf16, #tpu.memory_space<vmem>>, vector<128x128xbf16>
    %cst_8 = arith.constant dense<0.000000e+00> : vector<8x128xf32>
    %10 = tpu.matmul %8, %9, %cst_8 {dimension_numbers = #tpu.dot_dimension_numbers<[1], [0], [0], [1], [0, 0, 1, 1], [], []>} : vector<8x128xbf16>, vector<128x128xbf16>, vector<8x128xf32> -> vector<8x128xf32>
    %c0_9 = arith.constant 0 : index
    %c0_10 = arith.constant 0 : index
    %11 = vector.load %arg5[%c0_9, %c0_10] : memref<1x128xf32, #tpu.memory_space<vmem>>, vector<1x128xf32>
    %12 = vector.broadcast %11 : vector<1x128xf32> to vector<8x128xf32>
    %13 = arith.addf %10, %12 : vector<8x128xf32>
    %cst_11 = arith.constant 0.000000e+00 : f32
    %14 = vector.broadcast %cst_11 : f32 to vector<8x128xf32>
    %15 = arith.maximumf %13, %14 : vector<8x128xf32>
    %16 = arith.truncf %15 : vector<8x128xf32> to vector<8x128xbf16>
    %c0_12 = arith.constant 0 : index
    %c0_13 = arith.constant 0 : index
    %17 = vector.load %arg6[%c0_12, %c0_13] : memref<128x128xbf16, #tpu.memory_space<vmem>>, vector<128x128xbf16>
    %cst_14 = arith.constant dense<0.000000e+00> : vector<8x128xf32>
    %18 = tpu.matmul %16, %17, %cst_14 {dimension_numbers = #tpu.dot_dimension_numbers<[1], [0], [0], [1], [0, 0, 1, 1], [], []>} : vector<8x128xbf16>, vector<128x128xbf16>, vector<8x128xf32> -> vector<8x128xf32>
    %c0_15 = arith.constant 0 : index
    %c0_16 = arith.constant 0 : index
    %19 = vector.load %arg7[%c0_15, %c0_16] : memref<1x128xf32, #tpu.memory_space<vmem>>, vector<1x128xf32>
    %20 = vector.broadcast %19 : vector<1x128xf32> to vector<8x128xf32>
    %21 = arith.addf %18, %20 : vector<8x128xf32>
    %cst_17 = arith.constant 0.000000e+00 : f32
    %22 = vector.broadcast %cst_17 : f32 to vector<8x128xf32>
    %23 = arith.maximumf %21, %22 : vector<8x128xf32>
    %24 = arith.truncf %23 : vector<8x128xf32> to vector<8x128xbf16>
    %c0_18 = arith.constant 0 : index
    %c0_19 = arith.constant 0 : index
    %25 = vector.load %arg8[%c0_18, %c0_19] : memref<128x128xbf16, #tpu.memory_space<vmem>>, vector<128x128xbf16>
    %cst_20 = arith.constant dense<0.000000e+00> : vector<8x128xf32>
    %26 = tpu.matmul %24, %25, %cst_20 {dimension_numbers = #tpu.dot_dimension_numbers<[1], [0], [0], [1], [0, 0, 1, 1], [], []>} : vector<8x128xbf16>, vector<128x128xbf16>, vector<8x128xf32> -> vector<8x128xf32>
    %c0_21 = arith.constant 0 : index
    %c0_22 = arith.constant 0 : index
    %27 = vector.load %arg9[%c0_21, %c0_22] : memref<1x128xf32, #tpu.memory_space<vmem>>, vector<1x128xf32>
    %28 = vector.broadcast %27 : vector<1x128xf32> to vector<8x128xf32>
    %29 = arith.addf %26, %28 : vector<8x128xf32>
    %30 = vector.extract_strided_slice %29 {offsets = [0, 0], sizes = [8, 1], strides = [1, 1]} : vector<8x128xf32> to vector<8x1xf32>
    %31 = tpu.transpose %30, [1, 0] : vector<8x1xf32> -> vector<1x8xf32>
    %32 = math.tanh %31 : vector<1x8xf32>
    %c0_23 = arith.constant 0 : index
    %c0_24 = arith.constant 0 : index
    %33 = vector.load %arg10[%c0_23, %c0_24] : memref<1x8xf32, #tpu.memory_space<vmem>>, vector<1x8xf32>
    tpu.vector_store %arg10[%c0_23, %c0_24], %32 {strides = array<i32>} : memref<1x8xf32, #tpu.memory_space<vmem>>, vector<1x8xf32>,
    return
  }
  func.func @transform_0(%arg0: i32) -> (i32, i32) {
    %c0_i32 = arith.constant 0 : i32
    %c0_i32_0 = arith.constant 0 : i32
    return %arg0, %c0_i32 : i32, i32
  }
  func.func @transform_1(%arg0: i32) -> (i32, i32) {
    %c0_i32 = arith.constant 0 : i32
    %c0_i32_0 = arith.constant 0 : i32
    %c0_i32_1 = arith.constant 0 : i32
    return %c0_i32, %c0_i32_0 : i32, i32
  }
  func.func @transform_2(%arg0: i32) -> (i32, i32) {
    %c0_i32 = arith.constant 0 : i32
    %c0_i32_0 = arith.constant 0 : i32
    %c0_i32_1 = arith.constant 0 : i32
    return %c0_i32, %c0_i32_0 : i32, i32
  }
  func.func @transform_3(%arg0: i32) -> (i32, i32) {
    %c0_i32 = arith.constant 0 : i32
    %c0_i32_0 = arith.constant 0 : i32
    %c0_i32_1 = arith.constant 0 : i32
    return %c0_i32, %c0_i32_0 : i32, i32
  }
  func.func @transform_4(%arg0: i32) -> (i32, i32) {
    %c0_i32 = arith.constant 0 : i32
    %c0_i32_0 = arith.constant 0 : i32
    %c0_i32_1 = arith.constant 0 : i32
    return %c0_i32, %c0_i32_0 : i32, i32
  }
  func.func @transform_5(%arg0: i32) -> (i32, i32) {
    %c0_i32 = arith.constant 0 : i32
    %c0_i32_0 = arith.constant 0 : i32
    %c0_i32_1 = arith.constant 0 : i32
    return %c0_i32, %c0_i32_0 : i32, i32
  }
  func.func @transform_6(%arg0: i32) -> (i32, i32) {
    %c0_i32 = arith.constant 0 : i32
    %c0_i32_0 = arith.constant 0 : i32
    %c0_i32_1 = arith.constant 0 : i32
    return %c0_i32, %c0_i32_0 : i32, i32
  }
  func.func @transform_7(%arg0: i32) -> (i32, i32) {
    %c0_i32 = arith.constant 0 : i32
    %c0_i32_0 = arith.constant 0 : i32
    %c0_i32_1 = arith.constant 0 : i32
    return %c0_i32, %c0_i32_0 : i32, i32
  }
  func.func @transform_8(%arg0: i32) -> (i32, i32) {
    %c0_i32 = arith.constant 0 : i32
    %c0_i32_0 = arith.constant 0 : i32
    %c0_i32_1 = arith.constant 0 : i32
    return %c0_i32, %c0_i32_0 : i32, i32
  }
  func.func @transform_9(%arg0: i32) -> (i32, i32) {
    %c0_i32 = arith.constant 0 : i32
    %c0_i32_0 = arith.constant 0 : i32
    return %c0_i32, %arg0 : i32, i32
  }
}

</mosaic_0001>

<llo_original>
// kernel: tpu_custom_call.1
$region0: #{tpu_custom_call.1}
  #allocation0 [shape = 'u32[]', space=smem, size = 0x4, offset = 0x4, fixed_abs, tag = 'smem constant byte address 0x4 - core index']
  #allocation1 [shape = 'u32[144,128]{1,0:T(1,128)}', space=vmem, size = 0x12000, scoped, tag = 'internal scratch']
  %s0 = inlined_call_operand.hbm [shape: bf16[8,180], index: 0, kind: input, shape index: {}]
  %s1 = inlined_call_operand.hbm [shape: bf16[180,128], index: 1, kind: input, shape index: {}]
  %s2 = inlined_call_operand.vmem [shape: f32[1,128], index: 2, kind: input, shape index: {}]
  %s3 = inlined_call_operand.hbm [shape: bf16[128,128], index: 3, kind: input, shape index: {}]
  %s4 = inlined_call_operand.vmem [shape: f32[1,128], index: 4, kind: input, shape index: {}]
  %s5 = inlined_call_operand.hbm [shape: bf16[128,128], index: 5, kind: input, shape index: {}]
  %s6 = inlined_call_operand.vmem [shape: f32[1,128], index: 6, kind: input, shape index: {}]
  %s7 = inlined_call_operand.hbm [shape: bf16[128,128], index: 7, kind: input, shape index: {}]
  %s8 = inlined_call_operand.vmem [shape: f32[1,128], index: 8, kind: input, shape index: {}]
  %s9 = inlined_call_operand.hbm [shape: f32[1,8], index: 9, kind: output, shape index: {}]
  %s10 = sld [smem:[#allocation0]]
  $region66: #{tpu_custom_call.1} parent=0
    _
  %s12 = ssub.s32 1, %s10
  %s13 = scalar_select 0, %s12, %s10
  $region1: #{tpu_custom_call.1} parent=0
    #allocation2 [shape = 'u8[4096]{0}', space=vmem, size = 0x1000, scoped, tag = 'input window, operand 0, single buffered']
    #allocation3 [shape = 's32[1]{0}', space=sflag, size = 0x4, scoped, tag = 'scoped memory for tpu_custom_call.1']
    #allocation4 [shape = 's32[1]{0}', space=sflag, size = 0x4, scoped, tag = 'scoped memory for tpu_custom_call.1']
    #allocation5 [shape = 'u8[47104]{0}', space=vmem, size = 0xb800, scoped, tag = 'input window, operand 1, single buffered']
    #allocation6 [shape = 's32[1]{0}', space=sflag, size = 0x4, scoped, tag = 'scoped memory for tpu_custom_call.1']
    #allocation7 [shape = 'u8[32768]{0}', space=vmem, size = 0x8000, scoped, tag = 'input window, operand 3, single buffered']
    #allocation8 [shape = 'u8[32768]{0}', space=vmem, size = 0x8000, scoped, tag = 'input window, operand 5, single buffered']
    #allocation9 [shape = 's32[1]{0}', space=sflag, size = 0x4, scoped, tag = 'scoped memory for tpu_custom_call.1']
    #allocation10 [shape = 'u8[32768]{0}', space=vmem, size = 0x8000, scoped, tag = 'input window, operand 7, single buffered']
    #allocation11 [shape = 'u8[512]{0}', space=vmem, size = 0x400, scoped, tag = 'output window, operand 0, single buffered']
    %14 = vsyncpa [#allocation3], 0
    %15 = vsyncpa [#allocation6], 0
    %16 = vsyncpa [#allocation9], 0
    %17 = vsyncpa [#allocation4], 0
    // Predicated region
    $region2: #{tpu_custom_call.1} parent=1 // pred_check
      _
    $region3: #{tpu_custom_call.1} parent=1 // pred_check_branch
      %19 = sbr.rel (0) target = $region5
    $region4: #{tpu_custom_call.1} parent=1 // pred_region
      %s21 = ssub.s32 128, 128
      %22 = vsyncadd [#allocation3], %s21
      %s24 = sshll.u32 [#allocation2], 4
      %s25 = int_to_ptr.vmem [resolvable:$true] %s24
      %27 = dma.hbm_to_vmem [thread:$0]  %s0, 128, %s25, [#allocation3]
    $region5: #{tpu_custom_call.1} parent=1 // pred_fallthru
      _
    // Predicated region
    $region6: #{tpu_custom_call.1} parent=1 // pred_check
      _
    $region7: #{tpu_custom_call.1} parent=1 // pred_check_branch
      %29 = sbr.rel (0) target = $region9
    $region8: #{tpu_custom_call.1} parent=1 // pred_region
      %s31 = ssub.s32 1472, 1472
      %32 = vsyncadd [#allocation6], %s31
      %s33 = sshll.u32 [#allocation5], 4
      %s34 = int_to_ptr.vmem [resolvable:$true] %s33
      %39 = dma.hbm_to_vmem [thread:$0]  %s1, 1472, %s34, [#allocation6], 64, 64, 4
    $region9: #{tpu_custom_call.1} parent=1 // pred_fallthru
      _
    // Predicated region
    $region10: #{tpu_custom_call.1} parent=1 // pred_check
      _
    $region11: #{tpu_custom_call.1} parent=1 // pred_check_branch
      %41 = sbr.rel (0) target = $region13
    $region12: #{tpu_custom_call.1} parent=1 // pred_region
      _
    $region13: #{tpu_custom_call.1} parent=1 // pred_fallthru
      _
    // Predicated region
    $region14: #{tpu_custom_call.1} parent=1 // pred_check
      _
    $region15: #{tpu_custom_call.1} parent=1 // pred_check_branch
      %43 = sbr.rel (0) target = $region17
    $region16: #{tpu_custom_call.1} parent=1 // pred_region
      %s45 = ssub.s32 1024, 1024
      %46 = vsyncadd [#allocation6], %s45
      %s47 = sshll.u32 [#allocation7], 4
      %s48 = int_to_ptr.vmem [resolvable:$true] %s47
      %53 = dma.hbm_to_vmem [thread:$0]  %s3, 1024, %s48, [#allocation6], 64, 64, 4
    $region17: #{tpu_custom_call.1} parent=1 // pred_fallthru
      _
    // Predicated region
    $region18: #{tpu_custom_call.1} parent=1 // pred_check
      _
    $region19: #{tpu_custom_call.1} parent=1 // pred_check_branch
      %55 = sbr.rel (0) target = $region21
    $region20: #{tpu_custom_call.1} parent=1 // pred_region
      _
    $region21: #{tpu_custom_call.1} parent=1 // pred_fallthru
      _
    // Predicated region
    $region22: #{tpu_custom_call.1} parent=1 // pred_check
      _
    $region23: #{tpu_custom_call.1} parent=1 // pred_check_branch
      %57 = sbr.rel (0) target = $region25
    $region24: #{tpu_custom_call.1} parent=1 // pred_region
      %s59 = ssub.s32 1024, 1024
      %60 = vsyncadd [#allocation9], %s59
      %s61 = sshll.u32 [#allocation8], 4
      %s62 = int_to_ptr.vmem [resolvable:$true] %s61
      %67 = dma.hbm_to_vmem [thread:$0]  %s5, 1024, %s62, [#allocation9], 64, 64, 4
    $region25: #{tpu_custom_call.1} parent=1 // pred_fallthru
      _
    // Predicated region
    $region26: #{tpu_custom_call.1} parent=1 // pred_check
      _
    $region27: #{tpu_custom_call.1} parent=1 // pred_check_branch
      %69 = sbr.rel (0) target = $region29
    $region28: #{tpu_custom_call.1} parent=1 // pred_region
      _
    $region29: #{tpu_custom_call.1} parent=1 // pred_fallthru
      _
    // Predicated region
    $region30: #{tpu_custom_call.1} parent=1 // pred_check
      _
    $region31: #{tpu_custom_call.1} parent=1 // pred_check_branch
      %71 = sbr.rel (0) target = $region33
    $region32: #{tpu_custom_call.1} parent=1 // pred_region
      %s73 = ssub.s32 1024, 1024
      %74 = vsyncadd [#allocation9], %s73
      %s75 = sshll.u32 [#allocation10], 4
      %s76 = int_to_ptr.vmem [resolvable:$true] %s75
      %81 = dma.hbm_to_vmem [thread:$0]  %s7, 1024, %s76, [#allocation9], 64, 64, 4
    $region33: #{tpu_custom_call.1} parent=1 // pred_fallthru
      _
    // Predicated region
    $region34: #{tpu_custom_call.1} parent=1 // pred_check
      _
    $region35: #{tpu_custom_call.1} parent=1 // pred_check_branch
      %83 = sbr.rel (0) target = $region37
    $region36: #{tpu_custom_call.1} parent=1 // pred_region
      _
    $region37: #{tpu_custom_call.1} parent=1 // pred_fallthru
      _
    // Predicated region
    $region38: #{tpu_custom_call.1} parent=1 // pred_check
      _
    $region39: #{tpu_custom_call.1} parent=1 // pred_check_branch
      %85 = sbr.rel (0) target = $region41
    $region40: #{tpu_custom_call.1} parent=1 // pred_region
      %86 = dma.done [#allocation3], 128
    $region41: #{tpu_custom_call.1} parent=1 // pred_fallthru
      _
    // Predicated region
    $region42: #{tpu_custom_call.1} parent=1 // pred_check
      _
    $region43: #{tpu_custom_call.1} parent=1 // pred_check_branch
      %88 = sbr.rel (0) target = $region45
    $region44: #{tpu_custom_call.1} parent=1 // pred_region
      %89 = dma.done [#allocation6], 1472
    $region45: #{tpu_custom_call.1} parent=1 // pred_fallthru
      _
    // Predicated region
    $region46: #{tpu_custom_call.1} parent=1 // pred_check
      _
    $region47: #{tpu_custom_call.1} parent=1 // pred_check_branch
      %91 = sbr.rel (0) target = $region49
    $region48: #{tpu_custom_call.1} parent=1 // pred_region
      %92 = dma.done [#allocation6], 1024
    $region49: #{tpu_custom_call.1} parent=1 // pred_fallthru
      _
    // Predicated region
    $region50: #{tpu_custom_call.1} parent=1 // pred_check
      _
    $region51: #{tpu_custom_call.1} parent=1 // pred_check_branch
      %94 = sbr.rel (0) target = $region53
    $region52: #{tpu_custom_call.1} parent=1 // pred_region
      %95 = dma.done [#allocation9], 1024
    $region53: #{tpu_custom_call.1} parent=1 // pred_fallthru
      _
    // Predicated region
    $region54: #{tpu_custom_call.1} parent=1 // pred_check
      _
    $region55: #{tpu_custom_call.1} parent=1 // pred_check_branch
      %97 = sbr.rel (0) target = $region57
    $region56: #{tpu_custom_call.1} parent=1 // pred_region
      %98 = dma.done [#allocation9], 1024
    $region57: #{tpu_custom_call.1} parent=1 // pred_fallthru
      _
    %v100 = vld [vmem:[#allocation2] sm:$0xff]
    %v101 = vld [vmem:[#allocation5] sm:$0xf]
    %v102 = vld [vmem:[#allocation5 + $0x4] sm:$0xf]
    %v103 = vld [vmem:[#allocation5 + $0x8] sm:$0xf]
    %v104 = vld [vmem:[#allocation5 + $0xc] sm:$0xf]
    %v105 = vld [vmem:[#allocation5 + $0x10] sm:$0xf]
    %v106 = vld [vmem:[#allocation5 + $0x14] sm:$0xf]
    %v107 = vld [vmem:[#allocation5 + $0x18] sm:$0xf]
    %v108 = vld [vmem:[#allocation5 + $0x1c] sm:$0xf]
    %v109 = vld [vmem:[#allocation5 + $0x20] sm:$0xf]
    %v110 = vld [vmem:[#allocation5 + $0x24] sm:$0xf]
    %v111 = vld [vmem:[#allocation5 + $0x28] sm:$0xf]
    %v112 = vld [vmem:[#allocation5 + $0x2c] sm:$0xf]
    %v113 = vld [vmem:[#allocation5 + $0x30] sm:$0xf]
    %v114 = vld [vmem:[#allocation5 + $0x34] sm:$0xf]
    %v115 = vld [vmem:[#allocation5 + $0x38] sm:$0xf]
    %v116 = vld [vmem:[#allocation5 + $0x3c] sm:$0xf]
    %v117 = vld [vmem:[#allocation5 + $0x40] sm:$0xf]
    %v118 = vld [vmem:[#allocation5 + $0x44] sm:$0xf]
    %v119 = vld [vmem:[#allocation5 + $0x48] sm:$0xf]
    %v120 = vld [vmem:[#allocation5 + $0x4c] sm:$0xf]
    %v121 = vld [vmem:[#allocation5 + $0x50] sm:$0xf]
    %v122 = vld [vmem:[#allocation5 + $0x54] sm:$0xf]
    %v123 = vld [vmem:[#allocation5 + $0x58] sm:$0x3]
    %v124 = vld [vmem:[%s2] sm:$0x1]
    %v126 = vlaneseq
    %v127 = vshrl.u32 %v126, 7
    %v128 = vsub.s32 0, %v127
    %v129 = vrot.slane %v124, %v128
    %v132 = vunpack.c.l.b16 %v100
    %v133 = vunpack.c.h.b16 %v100
    %v134 = vpack.c.b16 %v132, %v132
    %v135 = vpack.c.b16 %v133, %v133
    %v160 = vunpack.c.l.b16 %v101
    %v161 = vunpack.c.l.b16 %v102
    %v162 = vunpack.c.l.b16 %v103
    %v163 = vunpack.c.l.b16 %v104
    %v164 = vunpack.c.l.b16 %v105
    %v165 = vunpack.c.l.b16 %v106
    %v166 = vunpack.c.l.b16 %v107
    %v167 = vunpack.c.l.b16 %v108
    %v168 = vunpack.c.l.b16 %v109
    %v169 = vunpack.c.l.b16 %v110
    %v170 = vunpack.c.l.b16 %v111
    %v171 = vunpack.c.l.b16 %v112
    %v172 = vunpack.c.l.b16 %v113
    %v173 = vunpack.c.l.b16 %v114
    %v174 = vunpack.c.l.b16 %v115
    %v175 = vunpack.c.l.b16 %v116
    %v176 = vunpack.c.l.b16 %v117
    %v177 = vunpack.c.l.b16 %v118
    %v178 = vunpack.c.l.b16 %v119
    %v179 = vunpack.c.l.b16 %v120
    %v180 = vunpack.c.l.b16 %v121
    %v181 = vunpack.c.l.b16 %v122
    %v182 = vunpack.c.l.b16 %v123
    %v183 = vpack.c.b16 %v161, %v160
    %v184 = vpack.c.b16 %v163, %v162
    %v185 = vpack.c.b16 %v165, %v164
    %v186 = vpack.c.b16 %v167, %v166
    %v187 = vpack.c.b16 %v169, %v168
    %v188 = vpack.c.b16 %v171, %v170
    %v189 = vpack.c.b16 %v173, %v172
    %v190 = vpack.c.b16 %v175, %v174
    %v191 = vpack.c.b16 %v177, %v176
    %v192 = vpack.c.b16 %v179, %v178
    %v193 = vpack.c.b16 %v181, %v180
    %v194 = vpack.c.b16 %v182, %v182
    %vm206 = vcmask 424960
    %v208 = vsel %vm206, %v135, 0
    %vm210 = vcmask 1041408
    %v212 = vsel %vm210, %v194, 0
    %214 = vmatprep.subr.bf16.mxu0 0
    %215 = vmatpush1.bf16.msra.mxu0 %v190
    %216 = vmatprep.subr.bf16.mxu0 0
    %217 = vmatpush1.bf16.msra.mxu0 %v189
    %218 = vmatprep.subr.bf16.mxu0 0
    %219 = vmatpush1.bf16.msra.mxu0 %v188
    %220 = vmatprep.subr.bf16.mxu0 0
    %221 = vmatpush1.bf16.msra.mxu0 %v187
    %222 = vmatprep.subr.bf16.mxu0 0
    %223 = vmatpush1.bf16.msra.mxu0 %v186
    %224 = vmatprep.subr.bf16.mxu0 0
    %225 = vmatpush1.bf16.msra.mxu0 %v185
    %226 = vmatprep.subr.bf16.mxu0 0
    %227 = vmatpush1.bf16.msra.mxu0 %v184
    %228 = vmatprep.subr.bf16.mxu0 0
    %229 = vmatpush1.bf16.msra.mxu0 %v183
    %230 = vmatprep.subr.bf16.mxu0 0
    %231 = vmatpush2.bf16.msra.mxu0 0
    %232 = vmatprep.subr.bf16.mxu0 0
    %233 = vmatpush2.bf16.msra.mxu0 0
    %234 = vmatprep.subr.bf16.mxu0 0
    %235 = vmatpush2.bf16.msra.mxu0 0
    %236 = vmatprep.subr.bf16.mxu0 0
    %237 = vmatpush2.bf16.msra.mxu0 0
    %238 = vmatprep.subr.bf16.mxu0 0
    %239 = vmatpush2.bf16.msra.mxu0 %v212
    %240 = vmatprep.subr.bf16.mxu0 0
    %241 = vmatpush2.bf16.msra.mxu0 %v193
    %242 = vmatprep.subr.bf16.mxu0 0
    %243 = vmatpush2.bf16.msra.mxu0 %v192
    %244 = vmatprep.subr.bf16.mxu0 0
    %245 = vmatpush2.bf16.msra.mxu0 %v191
    %246 = vmatprep.mubr.bf16.mxu0 %v208
    %247 = vmatmul.mubr.bf16.gmra.mxu0 %v134
    %v248 = vpop.f32.mrf.mxu0
    %v249 = vadd.f32 %v129, %v248
    %v250 = vpop.f32.mrf.mxu0
    %v251 = vpop.f32.mrf.mxu0
    %v252 = vpop.f32.mrf.mxu0
    %253 = vdwg.mxu0
    %v254 = vmax.f32 %v249, 0.0
    %v255 = vpack.c.bf16 %v254, %v254
    %v256 = vld [vmem:[#allocation7] sm:$0xf]
    %v257 = vld [vmem:[#allocation7 + $0x4] sm:$0xf]
    %v258 = vld [vmem:[#allocation7 + $0x8] sm:$0xf]
    %v259 = vld [vmem:[#allocation7 + $0xc] sm:$0xf]
    %v260 = vld [vmem:[#allocation7 + $0x10] sm:$0xf]
    %v261 = vld [vmem:[#allocation7 + $0x14] sm:$0xf]
    %v262 = vld [vmem:[#allocation7 + $0x18] sm:$0xf]
    %v263 = vld [vmem:[#allocation7 + $0x1c] sm:$0xf]
    %v264 = vld [vmem:[#allocation7 + $0x20] sm:$0xf]
    %v265 = vld [vmem:[#allocation7 + $0x24] sm:$0xf]
    %v266 = vld [vmem:[#allocation7 + $0x28] sm:$0xf]
    %v267 = vld [vmem:[#allocation7 + $0x2c] sm:$0xf]
    %v268 = vld [vmem:[#allocation7 + $0x30] sm:$0xf]
    %v269 = vld [vmem:[#allocation7 + $0x34] sm:$0xf]
    %v270 = vld [vmem:[#allocation7 + $0x38] sm:$0xf]
    %v271 = vld [vmem:[#allocation7 + $0x3c] sm:$0xf]
    %v272 = vld [vmem:[%s4] sm:$0x1]
    %v274 = vlaneseq
    %v275 = vshrl.u32 %v274, 7
    %v276 = vsub.s32 0, %v275
    %v277 = vrot.slane %v272, %v276
    %v295 = vunpack.c.l.b16 %v256
    %v296 = vunpack.c.l.b16 %v257
    %v297 = vunpack.c.l.b16 %v258
    %v298 = vunpack.c.l.b16 %v259
    %v299 = vunpack.c.l.b16 %v260
    %v300 = vunpack.c.l.b16 %v261
    %v301 = vunpack.c.l.b16 %v262
    %v302 = vunpack.c.l.b16 %v263
    %v303 = vunpack.c.l.b16 %v264
    %v304 = vunpack.c.l.b16 %v265
    %v305 = vunpack.c.l.b16 %v266
    %v306 = vunpack.c.l.b16 %v267
    %v307 = vunpack.c.l.b16 %v268
    %v308 = vunpack.c.l.b16 %v269
    %v309 = vunpack.c.l.b16 %v270
    %v310 = vunpack.c.l.b16 %v271
    %v311 = vpack.c.b16 %v296, %v295
    %v312 = vpack.c.b16 %v298, %v297
    %v313 = vpack.c.b16 %v300, %v299
    %v314 = vpack.c.b16 %v302, %v301
    %v315 = vpack.c.b16 %v304, %v303
    %v316 = vpack.c.b16 %v306, %v305
    %v317 = vpack.c.b16 %v308, %v307
    %v318 = vpack.c.b16 %v310, %v309
    %327 = vmatprep.subr.bf16.mxu0 0
    %328 = vmatpush1.bf16.msra.mxu0 %v318
    %329 = vmatprep.subr.bf16.mxu0 0
    %330 = vmatpush1.bf16.msra.mxu0 %v317
    %331 = vmatprep.subr.bf16.mxu0 0
    %332 = vmatpush1.bf16.msra.mxu0 %v316
    %333 = vmatprep.subr.bf16.mxu0 0
    %334 = vmatpush1.bf16.msra.mxu0 %v315
    %335 = vmatprep.subr.bf16.mxu0 0
    %336 = vmatpush1.bf16.msra.mxu0 %v314
    %337 = vmatprep.subr.bf16.mxu0 0
    %338 = vmatpush1.bf16.msra.mxu0 %v313
    %339 = vmatprep.subr.bf16.mxu0 0
    %340 = vmatpush1.bf16.msra.mxu0 %v312
    %341 = vmatprep.subr.bf16.mxu0 0
    %342 = vmatpush1.bf16.msra.mxu0 %v311
    %343 = vmatprep.subr.bf16.mxu0 0
    %344 = vmatpush2.bf16.msra.mxu0 0
    %345 = vmatprep.subr.bf16.mxu0 0
    %346 = vmatpush2.bf16.msra.mxu0 0
    %347 = vmatprep.subr.bf16.mxu0 0
    %348 = vmatpush2.bf16.msra.mxu0 0
    %349 = vmatprep.subr.bf16.mxu0 0
    %350 = vmatpush2.bf16.msra.mxu0 0
    %351 = vmatprep.subr.bf16.mxu0 0
    %352 = vmatpush2.bf16.msra.mxu0 0
    %353 = vmatprep.subr.bf16.mxu0 0
    %354 = vmatpush2.bf16.msra.mxu0 0
    %355 = vmatprep.subr.bf16.mxu0 0
    %356 = vmatpush2.bf16.msra.mxu0 0
    %357 = vmatprep.subr.bf16.mxu0 0
    %358 = vmatpush2.bf16.msra.mxu0 0
    %359 = vmatprep.mubr.bf16.mxu0 0
    %360 = vmatmul.mubr.bf16.gmra.mxu0 %v255
    %v361 = vpop.f32.mrf.mxu0
    %v362 = vadd.f32 %v277, %v361
    %v363 = vpop.f32.mrf.mxu0
    %v364 = vpop.f32.mrf.mxu0
    %v365 = vpop.f32.mrf.mxu0
    %366 = vdwg.mxu0
    %v367 = vmax.f32 %v362, 0.0
    %v368 = vpack.c.bf16 %v367, %v367
    %v369 = vld [vmem:[#allocation8] sm:$0xf]
    %v370 = vld [vmem:[#allocation8 + $0x4] sm:$0xf]
    %v371 = vld [vmem:[#allocation8 + $0x8] sm:$0xf]
    %v372 = vld [vmem:[#allocation8 + $0xc] sm:$0xf]
    %v373 = vld [vmem:[#allocation8 + $0x10] sm:$0xf]
    %v374 = vld [vmem:[#allocation8 + $0x14] sm:$0xf]
    %v375 = vld [vmem:[#allocation8 + $0x18] sm:$0xf]
    %v376 = vld [vmem:[#allocation8 + $0x1c] sm:$0xf]
    %v377 = vld [vmem:[#allocation8 + $0x20] sm:$0xf]
    %v378 = vld [vmem:[#allocation8 + $0x24] sm:$0xf]
    %v379 = vld [vmem:[#allocation8 + $0x28] sm:$0xf]
    %v380 = vld [vmem:[#allocation8 + $0x2c] sm:$0xf]
    %v381 = vld [vmem:[#allocation8 + $0x30] sm:$0xf]
    %v382 = vld [vmem:[#allocation8 + $0x34] sm:$0xf]
    %v383 = vld [vmem:[#allocation8 + $0x38] sm:$0xf]
    %v384 = vld [vmem:[#allocation8 + $0x3c] sm:$0xf]
    %v385 = vld [vmem:[%s6] sm:$0x1]
    %v387 = vlaneseq
    %v388 = vshrl.u32 %v387, 7
    %v389 = vsub.s32 0, %v388
    %v390 = vrot.slane %v385, %v389
    %v408 = vunpack.c.l.b16 %v369
    %v409 = vunpack.c.l.b16 %v370
    %v410 = vunpack.c.l.b16 %v371
    %v411 = vunpack.c.l.b16 %v372
    %v412 = vunpack.c.l.b16 %v373
    %v413 = vunpack.c.l.b16 %v374
    %v414 = vunpack.c.l.b16 %v375
    %v415 = vunpack.c.l.b16 %v376
    %v416 = vunpack.c.l.b16 %v377
    %v417 = vunpack.c.l.b16 %v378
    %v418 = vunpack.c.l.b16 %v379
    %v419 = vunpack.c.l.b16 %v380
    %v420 = vunpack.c.l.b16 %v381
    %v421 = vunpack.c.l.b16 %v382
    %v422 = vunpack.c.l.b16 %v383
    %v423 = vunpack.c.l.b16 %v384
    %v424 = vpack.c.b16 %v409, %v408
    %v425 = vpack.c.b16 %v411, %v410
    %v426 = vpack.c.b16 %v413, %v412
    %v427 = vpack.c.b16 %v415, %v414
    %v428 = vpack.c.b16 %v417, %v416
    %v429 = vpack.c.b16 %v419, %v418
    %v430 = vpack.c.b16 %v421, %v420
    %v431 = vpack.c.b16 %v423, %v422
    %440 = vmatprep.subr.bf16.mxu0 0
    %441 = vmatpush1.bf16.msra.mxu0 %v431
    %442 = vmatprep.subr.bf16.mxu0 0
    %443 = vmatpush1.bf16.msra.mxu0 %v430
    %444 = vmatprep.subr.bf16.mxu0 0
    %445 = vmatpush1.bf16.msra.mxu0 %v429
    %446 = vmatprep.subr.bf16.mxu0 0
    %447 = vmatpush1.bf16.msra.mxu0 %v428
    %448 = vmatprep.subr.bf16.mxu0 0
    %449 = vmatpush1.bf16.msra.mxu0 %v427
    %450 = vmatprep.subr.bf16.mxu0 0
    %451 = vmatpush1.bf16.msra.mxu0 %v426
    %452 = vmatprep.subr.bf16.mxu0 0
    %453 = vmatpush1.bf16.msra.mxu0 %v425
    %454 = vmatprep.subr.bf16.mxu0 0
    %455 = vmatpush1.bf16.msra.mxu0 %v424
    %456 = vmatprep.subr.bf16.mxu0 0
    %457 = vmatpush2.bf16.msra.mxu0 0
    %458 = vmatprep.subr.bf16.mxu0 0
    %459 = vmatpush2.bf16.msra.mxu0 0
    %460 = vmatprep.subr.bf16.mxu0 0
    %461 = vmatpush2.bf16.msra.mxu0 0
    %462 = vmatprep.subr.bf16.mxu0 0
    %463 = vmatpush2.bf16.msra.mxu0 0
    %464 = vmatprep.subr.bf16.mxu0 0
    %465 = vmatpush2.bf16.msra.mxu0 0
    %466 = vmatprep.subr.bf16.mxu0 0
    %467 = vmatpush2.bf16.msra.mxu0 0
    %468 = vmatprep.subr.bf16.mxu0 0
    %469 = vmatpush2.bf16.msra.mxu0 0
    %470 = vmatprep.subr.bf16.mxu0 0
    %471 = vmatpush2.bf16.msra.mxu0 0
    %472 = vmatprep.mubr.bf16.mxu0 0
    %473 = vmatmul.mubr.bf16.gmra.mxu0 %v368
    %v474 = vpop.f32.mrf.mxu0
    %v475 = vadd.f32 %v390, %v474
    %v476 = vpop.f32.mrf.mxu0
    %v477 = vpop.f32.mrf.mxu0
    %v478 = vpop.f32.mrf.mxu0
    %479 = vdwg.mxu0
    %v480 = vmax.f32 %v475, 0.0
    %v481 = vpack.c.bf16 %v480, %v480
    %v482 = vld [vmem:[#allocation10] sm:$0xf]
    %v483 = vld [vmem:[#allocation10 + $0x4] sm:$0xf]
    %v484 = vld [vmem:[#allocation10 + $0x8] sm:$0xf]
    %v485 = vld [vmem:[#allocation10 + $0xc] sm:$0xf]
    %v486 = vld [vmem:[#allocation10 + $0x10] sm:$0xf]
    %v487 = vld [vmem:[#allocation10 + $0x14] sm:$0xf]
    %v488 = vld [vmem:[#allocation10 + $0x18] sm:$0xf]
    %v489 = vld [vmem:[#allocation10 + $0x1c] sm:$0xf]
    %v490 = vld [vmem:[#allocation10 + $0x20] sm:$0xf]
    %v491 = vld [vmem:[#allocation10 + $0x24] sm:$0xf]
    %v492 = vld [vmem:[#allocation10 + $0x28] sm:$0xf]
    %v493 = vld [vmem:[#allocation10 + $0x2c] sm:$0xf]
    %v494 = vld [vmem:[#allocation10 + $0x30] sm:$0xf]
    %v495 = vld [vmem:[#allocation10 + $0x34] sm:$0xf]
    %v496 = vld [vmem:[#allocation10 + $0x38] sm:$0xf]
    %v497 = vld [vmem:[#allocation10 + $0x3c] sm:$0xf]
    %v498 = vld [vmem:[%s8] sm:$0x1]
    %v500 = vlaneseq
    %v501 = vshrl.u32 %v500, 7
    %v502 = vsub.s32 0, %v501
    %v503 = vrot.slane %v498, %v502
    %v521 = vunpack.c.l.b16 %v482
    %v522 = vunpack.c.l.b16 %v483
    %v523 = vunpack.c.l.b16 %v484
    %v524 = vunpack.c.l.b16 %v485
    %v525 = vunpack.c.l.b16 %v486
    %v526 = vunpack.c.l.b16 %v487
    %v527 = vunpack.c.l.b16 %v488
    %v528 = vunpack.c.l.b16 %v489
    %v529 = vunpack.c.l.b16 %v490
    %v530 = vunpack.c.l.b16 %v491
    %v531 = vunpack.c.l.b16 %v492
    %v532 = vunpack.c.l.b16 %v493
    %v533 = vunpack.c.l.b16 %v494
    %v534 = vunpack.c.l.b16 %v495
    %v535 = vunpack.c.l.b16 %v496
    %v536 = vunpack.c.l.b16 %v497
    %v537 = vpack.c.b16 %v522, %v521
    %v538 = vpack.c.b16 %v524, %v523
    %v539 = vpack.c.b16 %v526, %v525
    %v540 = vpack.c.b16 %v528, %v527
    %v541 = vpack.c.b16 %v530, %v529
    %v542 = vpack.c.b16 %v532, %v531
    %v543 = vpack.c.b16 %v534, %v533
    %v544 = vpack.c.b16 %v536, %v535
    %553 = vmatprep.subr.bf16.mxu0 0
    %554 = vmatpush1.bf16.msra.mxu0 %v544
    %555 = vmatprep.subr.bf16.mxu0 0
    %556 = vmatpush1.bf16.msra.mxu0 %v543
    %557 = vmatprep.subr.bf16.mxu0 0
    %558 = vmatpush1.bf16.msra.mxu0 %v542
    %559 = vmatprep.subr.bf16.mxu0 0
    %560 = vmatpush1.bf16.msra.mxu0 %v541
    %561 = vmatprep.subr.bf16.mxu0 0
    %562 = vmatpush1.bf16.msra.mxu0 %v540
    %563 = vmatprep.subr.bf16.mxu0 0
    %564 = vmatpush1.bf16.msra.mxu0 %v539
    %565 = vmatprep.subr.bf16.mxu0 0
    %566 = vmatpush1.bf16.msra.mxu0 %v538
    %567 = vmatprep.subr.bf16.mxu0 0
    %568 = vmatpush1.bf16.msra.mxu0 %v537
    %569 = vmatprep.subr.bf16.mxu0 0
    %570 = vmatpush2.bf16.msra.mxu0 0
    %571 = vmatprep.subr.bf16.mxu0 0
    %572 = vmatpush2.bf16.msra.mxu0 0
    %573 = vmatprep.subr.bf16.mxu0 0
    %574 = vmatpush2.bf16.msra.mxu0 0
    %575 = vmatprep.subr.bf16.mxu0 0
    %576 = vmatpush2.bf16.msra.mxu0 0
    %577 = vmatprep.subr.bf16.mxu0 0
    %578 = vmatpush2.bf16.msra.mxu0 0
    %579 = vmatprep.subr.bf16.mxu0 0
    %580 = vmatpush2.bf16.msra.mxu0 0
    %581 = vmatprep.subr.bf16.mxu0 0
    %582 = vmatpush2.bf16.msra.mxu0 0
    %583 = vmatprep.subr.bf16.mxu0 0
    %584 = vmatpush2.bf16.msra.mxu0 0
    %585 = vmatprep.mubr.bf16.mxu0 0
    %586 = vmatmul.mubr.bf16.gmra.mxu0 %v481
    %v587 = vpop.f32.mrf.mxu0
    %v588 = vadd.f32 %v503, %v587
    %v589 = vpop.f32.mrf.mxu0
    %v590 = vpop.f32.mrf.mxu0
    %v591 = vpop.f32.mrf.mxu0
    %592 = vdwg.mxu0
    %593 = vxpose.xlu0.b32.start [1/16] %v588, 128
    %594 = vxpose.xlu0.b32.cont [2/16] 0.0, 128
    %595 = vxpose.xlu0.b32.cont [3/16] 0.0, 128
    %596 = vxpose.xlu0.b32.cont [4/16] 0.0, 128
    %597 = vxpose.xlu0.b32.cont [5/16] 0.0, 128
    %598 = vxpose.xlu0.b32.cont [6/16] 0.0, 128
    %599 = vxpose.xlu0.b32.cont [7/16] 0.0, 128
    %600 = vxpose.xlu0.b32.cont [8/16] 0.0, 128
    %601 = vxpose.xlu0.b32.cont [9/16] 0.0, 128
    %602 = vxpose.xlu0.b32.cont [10/16] 0.0, 128
    %603 = vxpose.xlu0.b32.cont [11/16] 0.0, 128
    %604 = vxpose.xlu0.b32.cont [12/16] 0.0, 128
    %605 = vxpose.xlu0.b32.cont [13/16] 0.0, 128
    %606 = vxpose.xlu0.b32.cont [14/16] 0.0, 128
    %607 = vxpose.xlu0.b32.cont [15/16] 0.0, 128
    %608 = vxpose.xlu0.b32.end [16/16] 0.0, 128
    %v609 = vpop.trf.xlu0
    %v610 = vpop.trf.xlu0
    %v611 = vpop.trf.xlu0
    %v612 = vpop.trf.xlu0
    %v613 = vpop.trf.xlu0
    %v614 = vpop.trf.xlu0
    %v615 = vpop.trf.xlu0
    %v616 = vpop.trf.xlu0
    %v617 = vpop.trf.xlu0
    %v618 = vpop.trf.xlu0
    %v619 = vpop.trf.xlu0
    %v620 = vpop.trf.xlu0
    %v621 = vpop.trf.xlu0
    %v622 = vpop.trf.xlu0
    %v623 = vpop.trf.xlu0
    %v624 = vpop.trf.xlu0
    %v625 = vtanh.pop %v609
    %vm626 = vcmask 57344
    %627 = vst.msk [vmem:[#allocation11] sm:$0x1] %vm626, %v625
    // Predicated region
    $region58: #{tpu_custom_call.1} parent=1 // pred_check
      _
    $region59: #{tpu_custom_call.1} parent=1 // pred_check_branch
      %629 = sbr.rel (0) target = $region61
    $region60: #{tpu_custom_call.1} parent=1 // pred_region
      %s631 = ssub.s32 16, 16
      %632 = vsyncadd [#allocation4], %s631
      %s634 = sshll.u32 [#allocation11], 4
      %s635 = int_to_ptr.vmem [resolvable:$true] %s634
      %637 = dma.vmem_to_hbm [thread:$0]  %s635, 16, %s9, [#allocation4]
    $region61: #{tpu_custom_call.1} parent=1 // pred_fallthru
      _
    // Predicated region
    $region62: #{tpu_custom_call.1} parent=1 // pred_check
      _
    $region63: #{tpu_custom_call.1} parent=1 // pred_check_branch
      %639 = sbr.rel (0) target = $region65
    $region64: #{tpu_custom_call.1} parent=1 // pred_region
      %640 = dma.done [#allocation4], 16
    $region65: #{tpu_custom_call.1} parent=1 // pred_fallthru
      _
    %641 = vsyncpa [#allocation3], 1
    %642 = vsyncpa [#allocation6], 1
    %643 = vsyncpa [#allocation9], 1
    %644 = vsyncpa [#allocation4], 1

</llo_original>
